<compile_context>
chip_gen: v6e
topology: v6e:2x2x1
jax: 0.10.0
libtpu: 0.0.40
codegen_flags: <defaults>
</compile_context>

<pallas_src>
import functools

import numpy as np
import jax
import jax.numpy as jnp
from jax.experimental import pallas as pl
from jax.experimental.pallas import tpu as pltpu


_LANE = 128  # batch granule: batch sits on the 128-wide lane axis


def _round_up(x, m):
    return (x + m - 1) // m * m


# ----------------------------- Pallas kernel --------------------------------
def critic_kernel(sa_ref, wf_ref, b1_ref, w2x_ref, b2_ref, w3_ref, b3_ref,
                  o_ref, *, f1):
    """One batch tile, transposed [feature, batch] layout.

    sa_ref : [S+A, tile_b]  bf16  stacked [state; action]^T   (batch-tiled)
    wf_ref : [F1+F2, S+A]   bf16  block-diag [[W1, 0], [0, W2a]]  (resident)
    b1_ref : [F1, 1]        f32   (resident)
    w2x_ref: [F2, F1]       bf16  (resident)
    b2_ref : [F2, 1]        f32   (resident)
    w3_ref : [1, F2]        f32   (resident)
    b3_ref : [1, 1]         f32   (SMEM scalar)
    o_ref  : [1, tile_b]    f32   lane-dense output row
    """
    # Fused fc1 + fc2-action branch: one MXU push, K = S+A, N = tile_b.
    h = jnp.dot(wf_ref[...], sa_ref[...],
                preferred_element_type=jnp.float32)        # [F1+F2, tile_b]
    x_pre = h[:f1]        # W1  @ s^T   (slice at 8-aligned sublane row: free)
    a_ctr = h[f1:]        # W2a @ a^T

    # fc1 bias + relu (f32 VPU work; [F1,1] bias lane-broadcasts).
    x = jnp.maximum(x_pre + b1_ref[...], 0.0)              # [F1, tile_b]

    # fc2: W2x @ x + (W2a @ a) + b2, relu.
    xs = jnp.dot(w2x_ref[...], x.astype(w2x_ref.dtype),
                 preferred_element_type=jnp.float32)        # [F2, tile_b]
    xs = jnp.maximum(xs + a_ctr + b2_ref[...], 0.0)

    # fc3: contraction along the sublane (F2) axis -> lane-dense [1, tile_b]
    # row, unmasked vector stores, no transpose of xs needed.
    q = jnp.dot(w3_ref[...], xs, preferred_element_type=jnp.float32)
    o_ref[...] = (q + b3_ref[0, 0]).astype(o_ref.dtype)


# ------------------------------- wrapper -------------------------------------
def critic_forward(state, action, params, *, tile_b_max=2048,
                   min_grid_steps=1, compute_dtype=jnp.bfloat16):
    """Q(s, a) forward. state [B,S], action [B,A] -> [B,1] float32.

    min_grid_steps: pass 2 on v7x so the "parallel" batch axis is split across
    both TensorCores; 1 (default) is best on single-TC v5e/v6e.
    """
    wf, b1, w2x, b2, w3, b3 = params
    B, S = state.shape
    A = action.shape[1]
    F1 = b1.shape[0]
    F2 = b2.shape[0]
    assert wf.shape == (F1 + F2, S + A)

    # Balanced batch tiling on the lane axis (granule = 128 lanes).
    n_tiles = max(min_grid_steps, pl.cdiv(B, tile_b_max))
    tile_b = _round_up(pl.cdiv(B, n_tiles), _LANE)
    Bp = n_tiles * tile_b

    # Single layout pass: stack [state | action], pad batch, transpose to
    # [S+A, Bp] and cast to bf16.  The cast fuses into the transpose copy the
    # kernel needs anyway, so it costs no extra HBM pass.
    sa = jnp.concatenate([state, action], axis=1)           # [B, S+A]
    if Bp != B:
        sa = jnp.pad(sa, ((0, Bp - B), (0, 0)))
    sa_t = sa.T.astype(compute_dtype)                       # [S+A, Bp]

    flops = 2 * Bp * ((S + A) * (F1 + F2) + F1 * F2 + F2)
    bytes_accessed = (
        sa_t.size * sa_t.dtype.itemsize
        + sum(a.size * a.dtype.itemsize for a in (wf, b1, w2x, b2, w3, b3))
        + Bp * 4)

    def resident(arr):   # constant block index -> DMA'd once, VMEM-resident
        return pl.BlockSpec(arr.shape, lambda i: (0,) * arr.ndim)

    q_row = pl.pallas_call(
        functools.partial(critic_kernel, f1=F1),
        out_shape=jax.ShapeDtypeStruct((1, Bp), jnp.float32),
        grid=(n_tiles,),
        in_specs=[
            pl.BlockSpec((S + A, tile_b), lambda i: (0, i)),     # sa_t
            resident(wf), resident(b1), resident(w2x), resident(b2),
            resident(w3),
            pl.BlockSpec(memory_space=pltpu.MemorySpace.SMEM),    # b3 scalar
        ],
        out_specs=pl.BlockSpec((1, tile_b), lambda i: (0, i)),
        compiler_params=pltpu.CompilerParams(
            dimension_semantics=("parallel",)),
        cost_estimate=pl.CostEstimate(flops=flops, transcendentals=0,
                                      bytes_accessed=bytes_accessed),
    )(sa_t, wf, b1, w2x, b2, w3, b3)

    # [1, Bp] lane-dense row -> [B, 1] (leading dim is 1: same linear order).
    return q_row[0, :B].reshape(B, 1)


# --------------------------- parameter construction --------------------------
def init_params(key, state_size, action_size, fc1_units, fc2_units,
                compute_dtype=jnp.bfloat16):
    """Mirrors Critic_QNetwork.reset_parameters().

    hidden_init uses weight.size()[0] == out_features as 'fan_in' (a quirk of
    the reference code) -> lim = 1/sqrt(out_features).

    Returns kernel-ready params (transposed layout; MXU weights pre-cast to
    bf16 ONCE here so no per-call cast pass):
      wf  [F1+F2, S+A] bf16  block-diag [[W1, 0], [0, W2a]]
      b1  [F1, 1]      f32
      w2x [F2, F1]     bf16
      b2  [F2, 1]      f32
      w3  [1, F2]      f32
      b3  [1, 1]       f32
    """
    k1, k2, k3 = jax.random.split(key, 3)
    S, A, F1, F2 = state_size, action_size, fc1_units, fc2_units
    lim1 = 1.0 / np.sqrt(F1)
    lim2 = 1.0 / np.sqrt(F2)

    w1 = jax.random.uniform(k1, (F1, S), jnp.float32, -lim1, lim1)      # torch [out, in]
    w2 = jax.random.uniform(k2, (F2, F1 + A), jnp.float32, -lim2, lim2)
    w2x, w2a = w2[:, :F1], w2[:, F1:]
    w3 = jax.random.uniform(k3, (1, F2), jnp.float32, -0.003, 0.003)

    wf = jnp.zeros((F1 + F2, S + A), jnp.float32)
    wf = wf.at[:F1, :S].set(w1)
    wf = wf.at[F1:, S:].set(w2a)

    b1 = jnp.full((F1, 1), 0.1, jnp.float32)
    b2 = jnp.full((F2, 1), 0.1, jnp.float32)
    b3 = jnp.full((1, 1), 0.1, jnp.float32)

    return (wf.astype(compute_dtype), b1, w2x.astype(compute_dtype), b2, w3, b3)


def reference_forward(state, action, params, compute_dtype=jnp.bfloat16):
    """Pure-JAX reference, mirroring the kernel's bf16 rounding of MXU operands."""
    wf, b1, w2x, b2, w3, b3 = params
    S = state.shape[1]
    F1 = b1.shape[0]
    rd = lambda a: a.astype(compute_dtype).astype(jnp.float32)
    w1 = wf[:F1, :S].astype(jnp.float32)       # bf16 values, upcast
    w2a = wf[F1:, S:].astype(jnp.float32)
    w2x_f = w2x.astype(jnp.float32)
    x = jnp.maximum(rd(state) @ w1.T + b1[:, 0], 0.0)                  # [B, F1]
    xs = rd(x) @ w2x_f.T + rd(action) @ w2a.T + b2[:, 0]
    xs = jnp.maximum(xs, 0.0)
    q = xs @ w3[0] + b3[0, 0]
    return q[:, None]


# ----------------------------------- main ------------------------------------
if __name__ == "__main__":
    state_size, action_size = 24, 4
    fc1_units, fc2_units = 64, 32

    key = jax.random.PRNGKey(0)
    k_params, k_s1, k_a1, k_s2, k_a2 = jax.random.split(key, 5)
    params = init_params(k_params, state_size, action_size, fc1_units, fc2_units)

    fwd = jax.jit(critic_forward)
    fwd_2core = jax.jit(functools.partial(critic_forward, min_grid_steps=2))

    # small batch: single 128-lane tile, batch-padding path
    B1 = 8
    s1 = jax.random.normal(k_s1, (B1, state_size), jnp.float32)
    a1 = jax.random.normal(k_a1, (B1, action_size), jnp.float32)
    q1 = jax.block_until_ready(fwd(s1, a1, params))
    assert q1.shape == (B1, 1), q1.shape
    np.testing.assert_allclose(np.asarray(q1),
                               np.asarray(reference_forward(s1, a1, params)),
                               rtol=2e-2, atol=5e-3)

    # larger batch: single balanced tile (Bp == 640, no pad blow-up)
    B2 = 640
    s2 = jax.random.normal(k_s2, (B2, state_size), jnp.float32)
    a2 = jax.random.normal(k_a2, (B2, action_size), jnp.float32)
    q2 = jax.block_until_ready(fwd(s2, a2, params))
    assert q2.shape == (B2, 1), q2.shape
    np.testing.assert_allclose(np.asarray(q2),
                               np.asarray(reference_forward(s2, a2, params)),
                               rtol=2e-2, atol=5e-3)

    # same batch with a 2-step parallel grid (v7x both-TensorCore configuration)
    q3 = jax.block_until_ready(fwd_2core(s2, a2, params))
    assert q3.shape == (B2, 1), q3.shape
    np.testing.assert_allclose(np.asarray(q3), np.asarray(q2),
                               rtol=1e-5, atol=1e-5)

    # TODO(synk): use_bn=True (BatchNorm1d) and the Q_Distribution
    # softmax/log_softmax head are not exercised in this default config.
    print("KERNEL_OK")
</pallas_src>

<mosaic_0001>
module attributes {stable_mosaic.version = 11 : i64} {
  func.func @critic_kernel(%arg0: i32, %arg1: memref<28x128xbf16, #tpu.memory_space<vmem>>, %arg2: memref<96x28xbf16, #tpu.memory_space<vmem>>, %arg3: memref<64x1xf32, #tpu.memory_space<vmem>>, %arg4: memref<32x64xbf16, #tpu.memory_space<vmem>>, %arg5: memref<32x1xf32, #tpu.memory_space<vmem>>, %arg6: memref<1x32xf32, #tpu.memory_space<vmem>>, %arg7: memref<1x1xf32, #tpu.memory_space<smem>>, %arg8: memref<1x128xf32, #tpu.memory_space<vmem>>) attributes {dimension_semantics = [#tpu.dimension_semantics<parallel>], iteration_bounds = array<i64: 1>, scalar_prefetch = 0 : i64, scratch_operands = 0 : i64, tpu.core_type = #tpu.core_type<tc>, window_params = [{transform_indices = @transform_0, window_bounds = array<i64: 28, 128>}, {pipeline_mode = #tpu.pipeline_mode<synchronous>, transform_indices = @transform_1, window_bounds = array<i64: 96, 28>}, {pipeline_mode = #tpu.pipeline_mode<synchronous>, transform_indices = @transform_2, window_bounds = array<i64: 64, 1>}, {pipeline_mode = #tpu.pipeline_mode<synchronous>, transform_indices = @transform_3, window_bounds = array<i64: 32, 64>}, {pipeline_mode = #tpu.pipeline_mode<synchronous>, transform_indices = @transform_4, window_bounds = array<i64: 32, 1>}, {pipeline_mode = #tpu.pipeline_mode<synchronous>, transform_indices = @transform_5, window_bounds = array<i64: 1, 32>}, {transform_indices = @transform_6, window_bounds = array<i64: 1, 1>}, {transform_indices = @transform_7, window_bounds = array<i64: 1, 128>}]} {
    %c0 = arith.constant 0 : index
    %c0_0 = arith.constant 0 : index
    %0 = vector.load %arg2[%c0, %c0_0] : memref<96x28xbf16, #tpu.memory_space<vmem>>, vector<96x28xbf16>
    %c0_1 = arith.constant 0 : index
    %c0_2 = arith.constant 0 : index
    %1 = vector.load %arg1[%c0_1, %c0_2] : memref<28x128xbf16, #tpu.memory_space<vmem>>, vector<28x128xbf16>
    %cst = arith.constant dense<0.000000e+00> : vector<96x128xf32>
    %2 = tpu.matmul %0, %1, %cst {dimension_numbers = #tpu.dot_dimension_numbers<[1], [0], [0], [1], [0, 0, 1, 1], [], []>} : vector<96x28xbf16>, vector<28x128xbf16>, vector<96x128xf32> -> vector<96x128xf32>
    %3 = vector.extract_strided_slice %2 {offsets = [0, 0], sizes = [64, 128], strides = [1, 1]} : vector<96x128xf32> to vector<64x128xf32>
    %4 = vector.extract_strided_slice %2 {offsets = [64, 0], sizes = [32, 128], strides = [1, 1]} : vector<96x128xf32> to vector<32x128xf32>
    %c0_3 = arith.constant 0 : index
    %c0_4 = arith.constant 0 : index
    %5 = vector.load %arg3[%c0_3, %c0_4] : memref<64x1xf32, #tpu.memory_space<vmem>>, vector<64x1xf32>
    %6 = vector.broadcast %5 : vector<64x1xf32> to vector<64x128xf32>
    %7 = arith.addf %3, %6 : vector<64x128xf32>
    %cst_5 = arith.constant 0.000000e+00 : f32
    %8 = vector.broadcast %cst_5 : f32 to vector<64x128xf32>
    %9 = arith.maximumf %7, %8 : vector<64x128xf32>
    %c0_6 = arith.constant 0 : index
    %c0_7 = arith.constant 0 : index
    %10 = vector.load %arg4[%c0_6, %c0_7] : memref<32x64xbf16, #tpu.memory_space<vmem>>, vector<32x64xbf16>
    %11 = arith.truncf %9 : vector<64x128xf32> to vector<64x128xbf16>
    %cst_8 = arith.constant dense<0.000000e+00> : vector<32x128xf32>
    %12 = tpu.matmul %10, %11, %cst_8 {dimension_numbers = #tpu.dot_dimension_numbers<[1], [0], [0], [1], [0, 0, 1, 1], [], []>} : vector<32x64xbf16>, vector<64x128xbf16>, vector<32x128xf32> -> vector<32x128xf32>
    %13 = arith.addf %12, %4 : vector<32x128xf32>
    %c0_9 = arith.constant 0 : index
    %c0_10 = arith.constant 0 : index
    %14 = vector.load %arg5[%c0_9, %c0_10] : memref<32x1xf32, #tpu.memory_space<vmem>>, vector<32x1xf32>
    %15 = vector.broadcast %14 : vector<32x1xf32> to vector<32x128xf32>
    %16 = arith.addf %13, %15 : vector<32x128xf32>
    %cst_11 = arith.constant 0.000000e+00 : f32
    %17 = vector.broadcast %cst_11 : f32 to vector<32x128xf32>
    %18 = arith.maximumf %16, %17 : vector<32x128xf32>
    %c0_12 = arith.constant 0 : index
    %c0_13 = arith.constant 0 : index
    %19 = vector.load %arg6[%c0_12, %c0_13] : memref<1x32xf32, #tpu.memory_space<vmem>>, vector<1x32xf32>
    %cst_14 = arith.constant dense<0.000000e+00> : vector<1x128xf32>
    %20 = tpu.matmul %19, %18, %cst_14 {dimension_numbers = #tpu.dot_dimension_numbers<[1], [0], [0], [1], [0, 0, 1, 1], [], []>} : vector<1x32xf32>, vector<32x128xf32>, vector<1x128xf32> -> vector<1x128xf32>
    %c0_15 = arith.constant 0 : index
    %c0_16 = arith.constant 0 : index
    %21 = memref.load %arg7[%c0_15, %c0_16] : memref<1x1xf32, #tpu.memory_space<smem>>
    %22 = vector.broadcast %21 : f32 to vector<1x128xf32>
    %23 = arith.addf %20, %22 : vector<1x128xf32>
    %c0_17 = arith.constant 0 : index
    %c0_18 = arith.constant 0 : index
    %24 = vector.load %arg8[%c0_17, %c0_18] : memref<1x128xf32, #tpu.memory_space<vmem>>, vector<1x128xf32>
    tpu.vector_store %arg8[%c0_17, %c0_18], %23 {strides = array<i32>} : memref<1x128xf32, #tpu.memory_space<vmem>>, vector<1x128xf32>,
    return
  }
  func.func @transform_0(%arg0: i32) -> (i32, i32) {
    %c0_i32 = arith.constant 0 : i32
    %c0_i32_0 = arith.constant 0 : i32
    return %c0_i32, %arg0 : i32, i32
  }
  func.func @transform_1(%arg0: i32) -> (i32, i32) {
    %c0_i32 = arith.constant 0 : i32
    %c0_i32_0 = arith.constant 0 : i32
    %c0_i32_1 = arith.constant 0 : i32
    return %c0_i32, %c0_i32_0 : i32, i32
  }
  func.func @transform_2(%arg0: i32) -> (i32, i32) {
    %c0_i32 = arith.constant 0 : i32
    %c0_i32_0 = arith.constant 0 : i32
    %c0_i32_1 = arith.constant 0 : i32
    return %c0_i32, %c0_i32_0 : i32, i32
  }
  func.func @transform_3(%arg0: i32) -> (i32, i32) {
    %c0_i32 = arith.constant 0 : i32
    %c0_i32_0 = arith.constant 0 : i32
    %c0_i32_1 = arith.constant 0 : i32
    return %c0_i32, %c0_i32_0 : i32, i32
  }
  func.func @transform_4(%arg0: i32) -> (i32, i32) {
    %c0_i32 = arith.constant 0 : i32
    %c0_i32_0 = arith.constant 0 : i32
    %c0_i32_1 = arith.constant 0 : i32
    return %c0_i32, %c0_i32_0 : i32, i32
  }
  func.func @transform_5(%arg0: i32) -> (i32, i32) {
    %c0_i32 = arith.constant 0 : i32
    %c0_i32_0 = arith.constant 0 : i32
    %c0_i32_1 = arith.constant 0 : i32
    return %c0_i32, %c0_i32_0 : i32, i32
  }
  func.func @transform_6(%arg0: i32) -> (i32, i32) {
    %c0_i32 = arith.constant 0 : i32
    %c0_i32_0 = arith.constant 0 : i32
    %c0_i32_1 = arith.constant 0 : i32
    return %c0_i32, %c0_i32_0 : i32, i32
  }
  func.func @transform_7(%arg0: i32) -> (i32, i32) {
    %c0_i32 = arith.constant 0 : i32
    %c0_i32_0 = arith.constant 0 : i32
    return %c0_i32, %arg0 : i32, i32
  }
}

</mosaic_0001>

<llo_original>
// kernel: critic_forward.1
$region0: #{critic_forward.1}
  #allocation0 [shape = 'u32[]', space=smem, size = 0x4, offset = 0x4, fixed_abs, tag = 'smem constant byte address 0x4 - core index']
  #allocation1 [shape = 'u32[144,128]{1,0:T(1,128)}', space=vmem, size = 0x12000, scoped, tag = 'internal scratch']
  #allocation2 [shape = 'f32[1,1]{1,0:T(1,128)S(6)}', space=smem, size = 0x200, scoped, tag = 'scoped memory for critic_forward.1']
  %s0 = inlined_call_operand.vmem [shape: bf16[28,128], index: 0, kind: input, shape index: {}]
  %s1 = inlined_call_operand.vmem [shape: bf16[96,28], index: 1, kind: input, shape index: {}]
  %s2 = inlined_call_operand.vmem [shape: f32[64,1], index: 2, kind: input, shape index: {}]
  %s3 = inlined_call_operand.vmem [shape: bf16[32,64], index: 3, kind: input, shape index: {}]
  %s4 = inlined_call_operand.vmem [shape: f32[32,1], index: 4, kind: input, shape index: {}]
  %s5 = inlined_call_operand.vmem [shape: f32[1,32], index: 5, kind: input, shape index: {}]
  %s6 = inlined_call_operand.<no memory space> [shape: f32[1,1], index: 6, kind: input, shape index: {}]
  %s7 = inlined_call_operand.vmem [shape: f32[1,128], index: 7, kind: output, shape index: {}]
  %s8 = sld [smem:[#allocation0]]
  $region38: #{critic_forward.1} parent=0
    _
  %s10 = ssub.s32 1, %s8
  %s11 = scalar_select 0, %s10, %s8
  %12 = sst [smem:[#allocation2]] %s6
  // Predicated region
  $region2: #{critic_forward.1} parent=0 // pred_check
    _
  $region3: #{critic_forward.1} parent=0 // pred_check_branch
    %14 = sbr.rel (0) target = $region5
  $region4: #{critic_forward.1} parent=0 // pred_region
    _
  $region5: #{critic_forward.1} parent=0 // pred_fallthru
    _
  // Predicated region
  $region6: #{critic_forward.1} parent=0 // pred_check
    _
  $region7: #{critic_forward.1} parent=0 // pred_check_branch
    %16 = sbr.rel (0) target = $region9
  $region8: #{critic_forward.1} parent=0 // pred_region
    _
  $region9: #{critic_forward.1} parent=0 // pred_fallthru
    _
  // Predicated region
  $region10: #{critic_forward.1} parent=0 // pred_check
    _
  $region11: #{critic_forward.1} parent=0 // pred_check_branch
    %18 = sbr.rel (0) target = $region13
  $region12: #{critic_forward.1} parent=0 // pred_region
    _
  $region13: #{critic_forward.1} parent=0 // pred_fallthru
    _
  // Predicated region
  $region14: #{critic_forward.1} parent=0 // pred_check
    _
  $region15: #{critic_forward.1} parent=0 // pred_check_branch
    %20 = sbr.rel (0) target = $region17
  $region16: #{critic_forward.1} parent=0 // pred_region
    _
  $region17: #{critic_forward.1} parent=0 // pred_fallthru
    _
  // Predicated region
  $region18: #{critic_forward.1} parent=0 // pred_check
    _
  $region19: #{critic_forward.1} parent=0 // pred_check_branch
    %22 = sbr.rel (0) target = $region21
  $region20: #{critic_forward.1} parent=0 // pred_region
    _
  $region21: #{critic_forward.1} parent=0 // pred_fallthru
    _
  // Predicated region
  $region22: #{critic_forward.1} parent=0 // pred_check
    _
  $region23: #{critic_forward.1} parent=0 // pred_check_branch
    %24 = sbr.rel (0) target = $region25
  $region24: #{critic_forward.1} parent=0 // pred_region
    _
  $region25: #{critic_forward.1} parent=0 // pred_fallthru
    _
  // Predicated region
  $region26: #{critic_forward.1} parent=0 // pred_check
    _
  $region27: #{critic_forward.1} parent=0 // pred_check_branch
    %26 = sbr.rel (0) target = $region29
  $region28: #{critic_forward.1} parent=0 // pred_region
    _
  $region29: #{critic_forward.1} parent=0 // pred_fallthru
    _
  %v28 = vld [vmem:[%s1] sm:$0xf]
  %v29 = vld [vmem:[%s1 + $0x4] sm:$0xf]
  %v30 = vld [vmem:[%s1 + $0x8] sm:$0xf]
  %v31 = vld [vmem:[%s1 + $0xc] sm:$0xf]
  %v32 = vld [vmem:[%s1 + $0x10] sm:$0xf]
  %v33 = vld [vmem:[%s1 + $0x14] sm:$0xf]
  %v34 = vld [vmem:[%s1 + $0x18] sm:$0xf]
  %v35 = vld [vmem:[%s1 + $0x1c] sm:$0xf]
  %v36 = vld [vmem:[%s1 + $0x20] sm:$0xf]
  %v37 = vld [vmem:[%s1 + $0x24] sm:$0xf]
  %v38 = vld [vmem:[%s1 + $0x28] sm:$0xf]
  %v39 = vld [vmem:[%s1 + $0x2c] sm:$0xf]
  %v40 = vld [vmem:[%s0] sm:$0xf]
  %v41 = vld [vmem:[%s0 + $0x4] sm:$0xf]
  %v42 = vld [vmem:[%s0 + $0x8] sm:$0xf]
  %v43 = vld [vmem:[%s0 + $0xc] sm:$0x3]
  %v56 = vunpack.c.l.b16 %v28
  %v57 = vunpack.c.l.b16 %v29
  %v58 = vunpack.c.l.b16 %v30
  %v59 = vunpack.c.l.b16 %v31
  %v60 = vunpack.c.l.b16 %v32
  %v61 = vunpack.c.l.b16 %v33
  %v62 = vunpack.c.l.b16 %v34
  %v63 = vunpack.c.l.b16 %v35
  %v64 = vunpack.c.l.b16 %v36
  %v65 = vunpack.c.l.b16 %v37
  %v66 = vunpack.c.l.b16 %v38
  %v67 = vunpack.c.l.b16 %v39
  %v68 = vpack.c.b16 %v57, %v56
  %v69 = vpack.c.b16 %v59, %v58
  %v70 = vpack.c.b16 %v61, %v60
  %v71 = vpack.c.b16 %v63, %v62
  %v72 = vpack.c.b16 %v65, %v64
  %v73 = vpack.c.b16 %v67, %v66
  %v78 = vunpack.c.l.b16 %v40
  %v79 = vunpack.c.l.b16 %v41
  %v80 = vunpack.c.l.b16 %v42
  %v81 = vunpack.c.l.b16 %v43
  %v82 = vpack.c.b16 %v79, %v78
  %v83 = vpack.c.b16 %v81, %v80
  %vm85 = vcmask 228352
  %v87 = vsel %vm85, %v68, 0
  %v90 = vsel %vm85, %v69, 0
  %v93 = vsel %vm85, %v70, 0
  %v96 = vsel %vm85, %v71, 0
  %v99 = vsel %vm85, %v72, 0
  %v102 = vsel %vm85, %v73, 0
  %vm104 = vcmask 1045504
  %v106 = vsel %vm104, %v83, 0
  %108 = vmatprep.subr.bf16.mxu0 0
  %109 = vmatpush1.bf16.msra.mxu0 0
  %110 = vmatprep.subr.bf16.mxu0 0
  %111 = vmatpush1.bf16.msra.mxu0 0
  %112 = vmatprep.subr.bf16.mxu0 0
  %113 = vmatpush1.bf16.msra.mxu0 0
  %114 = vmatprep.subr.bf16.mxu0 0
  %115 = vmatpush1.bf16.msra.mxu0 0
  %116 = vmatprep.subr.bf16.mxu0 0
  %117 = vmatpush1.bf16.msra.mxu0 0
  %118 = vmatprep.subr.bf16.mxu0 0
  %119 = vmatpush1.bf16.msra.mxu0 0
  %120 = vmatprep.subr.bf16.mxu0 0
  %121 = vmatpush1.bf16.msra.mxu0 %v106
  %122 = vmatprep.subr.bf16.mxu0 0
  %123 = vmatpush1.bf16.msra.mxu0 %v82
  %124 = vmatprep.subr.bf16.mxu0 0
  %125 = vmatpush2.bf16.msra.mxu0 0
  %126 = vmatprep.subr.bf16.mxu0 0
  %127 = vmatpush2.bf16.msra.mxu0 0
  %128 = vmatprep.subr.bf16.mxu0 0
  %129 = vmatpush2.bf16.msra.mxu0 0
  %130 = vmatprep.subr.bf16.mxu0 0
  %131 = vmatpush2.bf16.msra.mxu0 0
  %132 = vmatprep.subr.bf16.mxu0 0
  %133 = vmatpush2.bf16.msra.mxu0 0
  %134 = vmatprep.subr.bf16.mxu0 0
  %135 = vmatpush2.bf16.msra.mxu0 0
  %136 = vmatprep.subr.bf16.mxu0 0
  %137 = vmatpush2.bf16.msra.mxu0 0
  %138 = vmatprep.subr.bf16.mxu0 0
  %139 = vmatpush2.bf16.msra.mxu0 0
  %140 = vmatprep.mubr.bf16.mxu0 0
  %141 = vmatmul.mubr.bf16.gmra.mxu0 %v87
  %v142 = vpop.f32.mrf.mxu0
  %v143 = vadd.f32 0.0, %v142
  %v144 = vpop.f32.mrf.mxu0
  %v145 = vpop.f32.mrf.mxu0
  %v146 = vadd.f32 0.0, %v145
  %v147 = vpop.f32.mrf.mxu0
  %148 = vmatprep.mubr.bf16.mxu0 0
  %149 = vmatmul.mubr.bf16.gmra.mxu0 %v90
  %v150 = vpop.f32.mrf.mxu0
  %v151 = vadd.f32 0.0, %v150
  %v152 = vpop.f32.mrf.mxu0
  %v153 = vpop.f32.mrf.mxu0
  %v154 = vadd.f32 0.0, %v153
  %v155 = vpop.f32.mrf.mxu0
  %156 = vmatprep.mubr.bf16.mxu0 0
  %157 = vmatmul.mubr.bf16.gmra.mxu0 %v93
  %v158 = vpop.f32.mrf.mxu0
  %v159 = vadd.f32 0.0, %v158
  %v160 = vpop.f32.mrf.mxu0
  %v161 = vpop.f32.mrf.mxu0
  %v162 = vadd.f32 0.0, %v161
  %v163 = vpop.f32.mrf.mxu0
  %164 = vmatprep.mubr.bf16.mxu0 0
  %165 = vmatmul.mubr.bf16.gmra.mxu0 %v96
  %v166 = vpop.f32.mrf.mxu0
  %v167 = vadd.f32 0.0, %v166
  %v168 = vpop.f32.mrf.mxu0
  %v169 = vpop.f32.mrf.mxu0
  %v170 = vadd.f32 0.0, %v169
  %v171 = vpop.f32.mrf.mxu0
  %172 = vmatprep.mubr.bf16.mxu0 0
  %173 = vmatmul.mubr.bf16.gmra.mxu0 %v99
  %v174 = vpop.f32.mrf.mxu0
  %v175 = vadd.f32 0.0, %v174
  %v176 = vpop.f32.mrf.mxu0
  %v177 = vpop.f32.mrf.mxu0
  %v178 = vadd.f32 0.0, %v177
  %v179 = vpop.f32.mrf.mxu0
  %180 = vmatprep.mubr.bf16.mxu0 0
  %181 = vmatmul.mubr.bf16.gmra.mxu0 %v102
  %v182 = vpop.f32.mrf.mxu0
  %v183 = vadd.f32 0.0, %v182
  %v184 = vpop.f32.mrf.mxu0
  %v185 = vpop.f32.mrf.mxu0
  %v186 = vadd.f32 0.0, %v185
  %v187 = vpop.f32.mrf.mxu0
  %188 = vdwg.mxu0
  %v189 = vld [vmem:[%s2] sm:$0xff]
  %v190 = vld [vmem:[%s2 + $0x8] sm:$0xff]
  %v191 = vld [vmem:[%s2 + $0x10] sm:$0xff]
  %v192 = vld [vmem:[%s2 + $0x18] sm:$0xff]
  %v193 = vld [vmem:[%s2 + $0x20] sm:$0xff]
  %v194 = vld [vmem:[%s2 + $0x28] sm:$0xff]
  %v195 = vld [vmem:[%s2 + $0x30] sm:$0xff]
  %v196 = vld [vmem:[%s2 + $0x38] sm:$0xff]
  %198 = vset.pattern.permute.xlu0 0
  %199 = vperm.xlu0 %198, %v189
  %v200 = vpop.permute.xlu0 %199
  %203 = vset.pattern.permute.xlu0 0
  %204 = vperm.xlu0 %203, %v190
  %v205 = vpop.permute.xlu0 %204
  %208 = vset.pattern.permute.xlu0 0
  %209 = vperm.xlu0 %208, %v191
  %v210 = vpop.permute.xlu0 %209
  %213 = vset.pattern.permute.xlu0 0
  %214 = vperm.xlu0 %213, %v192
  %v215 = vpop.permute.xlu0 %214
  %218 = vset.pattern.permute.xlu0 0
  %219 = vperm.xlu0 %218, %v193
  %v220 = vpop.permute.xlu0 %219
  %223 = vset.pattern.permute.xlu0 0
  %224 = vperm.xlu0 %223, %v194
  %v225 = vpop.permute.xlu0 %224
  %228 = vset.pattern.permute.xlu0 0
  %229 = vperm.xlu0 %228, %v195
  %v230 = vpop.permute.xlu0 %229
  %233 = vset.pattern.permute.xlu0 0
  %234 = vperm.xlu0 %233, %v196
  %v235 = vpop.permute.xlu0 %234
  %v237 = vadd.f32 %v143, %v200
  %v238 = vadd.f32 %v146, %v205
  %v239 = vadd.f32 %v151, %v210
  %v240 = vadd.f32 %v154, %v215
  %v241 = vadd.f32 %v159, %v220
  %v242 = vadd.f32 %v162, %v225
  %v243 = vadd.f32 %v167, %v230
  %v244 = vadd.f32 %v170, %v235
  %v245 = vmax.f32 %v237, 0.0
  %v246 = vmax.f32 %v238, 0.0
  %v247 = vmax.f32 %v239, 0.0
  %v248 = vmax.f32 %v240, 0.0
  %v249 = vmax.f32 %v241, 0.0
  %v250 = vmax.f32 %v242, 0.0
  %v251 = vmax.f32 %v243, 0.0
  %v252 = vmax.f32 %v244, 0.0
  %v253 = vld [vmem:[%s3] sm:$0xf]
  %v254 = vld [vmem:[%s3 + $0x4] sm:$0xf]
  %v255 = vld [vmem:[%s3 + $0x8] sm:$0xf]
  %v256 = vld [vmem:[%s3 + $0xc] sm:$0xf]
  %v257 = vpack.c.bf16 %v246, %v245
  %v258 = vpack.c.bf16 %v248, %v247
  %v259 = vpack.c.bf16 %v250, %v249
  %v260 = vpack.c.bf16 %v252, %v251
  %v265 = vunpack.c.l.b16 %v253
  %v266 = vunpack.c.l.b16 %v254
  %v267 = vunpack.c.l.b16 %v255
  %v268 = vunpack.c.l.b16 %v256
  %v269 = vpack.c.b16 %v266, %v265
  %v270 = vpack.c.b16 %v268, %v267
  %vm271 = vcmask 523264
  %v273 = vsel %vm271, %v269, 0
  %v276 = vsel %vm271, %v270, 0
  %278 = vmatprep.subr.bf16.mxu0 0
  %279 = vmatpush1.bf16.msra.mxu0 0
  %280 = vmatprep.subr.bf16.mxu0 0
  %281 = vmatpush1.bf16.msra.mxu0 0
  %282 = vmatprep.subr.bf16.mxu0 0
  %283 = vmatpush1.bf16.msra.mxu0 0
  %284 = vmatprep.subr.bf16.mxu0 0
  %285 = vmatpush1.bf16.msra.mxu0 0
  %286 = vmatprep.subr.bf16.mxu0 0
  %287 = vmatpush1.bf16.msra.mxu0 %v260
  %288 = vmatprep.subr.bf16.mxu0 0
  %289 = vmatpush1.bf16.msra.mxu0 %v259
  %290 = vmatprep.subr.bf16.mxu0 0
  %291 = vmatpush1.bf16.msra.mxu0 %v258
  %292 = vmatprep.subr.bf16.mxu0 0
  %293 = vmatpush1.bf16.msra.mxu0 %v257
  %294 = vmatprep.subr.bf16.mxu0 0
  %295 = vmatpush2.bf16.msra.mxu0 0
  %296 = vmatprep.subr.bf16.mxu0 0
  %297 = vmatpush2.bf16.msra.mxu0 0
  %298 = vmatprep.subr.bf16.mxu0 0
  %299 = vmatpush2.bf16.msra.mxu0 0
  %300 = vmatprep.subr.bf16.mxu0 0
  %301 = vmatpush2.bf16.msra.mxu0 0
  %302 = vmatprep.subr.bf16.mxu0 0
  %303 = vmatpush2.bf16.msra.mxu0 0
  %304 = vmatprep.subr.bf16.mxu0 0
  %305 = vmatpush2.bf16.msra.mxu0 0
  %306 = vmatprep.subr.bf16.mxu0 0
  %307 = vmatpush2.bf16.msra.mxu0 0
  %308 = vmatprep.subr.bf16.mxu0 0
  %309 = vmatpush2.bf16.msra.mxu0 0
  %310 = vmatprep.mubr.bf16.mxu0 0
  %311 = vmatmul.mubr.bf16.gmra.mxu0 %v273
  %v312 = vpop.f32.mrf.mxu0
  %v313 = vadd.f32 %v175, %v312
  %v314 = vpop.f32.mrf.mxu0
  %v315 = vpop.f32.mrf.mxu0
  %v316 = vadd.f32 %v178, %v315
  %v317 = vpop.f32.mrf.mxu0
  %318 = vmatprep.mubr.bf16.mxu0 0
  %319 = vmatmul.mubr.bf16.gmra.mxu0 %v276
  %v320 = vpop.f32.mrf.mxu0
  %v321 = vadd.f32 %v183, %v320
  %v322 = vpop.f32.mrf.mxu0
  %v323 = vpop.f32.mrf.mxu0
  %v324 = vadd.f32 %v186, %v323
  %v325 = vpop.f32.mrf.mxu0
  %326 = vdwg.mxu0
  %v327 = vld [vmem:[%s4] sm:$0xff]
  %v328 = vld [vmem:[%s4 + $0x8] sm:$0xff]
  %v329 = vld [vmem:[%s4 + $0x10] sm:$0xff]
  %v330 = vld [vmem:[%s4 + $0x18] sm:$0xff]
  %332 = vset.pattern.permute.xlu0 0
  %333 = vperm.xlu0 %332, %v327
  %v334 = vpop.permute.xlu0 %333
  %337 = vset.pattern.permute.xlu0 0
  %338 = vperm.xlu0 %337, %v328
  %v339 = vpop.permute.xlu0 %338
  %342 = vset.pattern.permute.xlu0 0
  %343 = vperm.xlu0 %342, %v329
  %v344 = vpop.permute.xlu0 %343
  %347 = vset.pattern.permute.xlu0 0
  %348 = vperm.xlu0 %347, %v330
  %v349 = vpop.permute.xlu0 %348
  %v351 = vadd.f32 %v313, %v334
  %v352 = vadd.f32 %v316, %v339
  %v353 = vadd.f32 %v321, %v344
  %v354 = vadd.f32 %v324, %v349
  %v355 = vmax.f32 %v351, 0.0
  %v356 = vmax.f32 %v352, 0.0
  %v357 = vmax.f32 %v353, 0.0
  %v358 = vmax.f32 %v354, 0.0
  %v359 = vld [vmem:[%s5] sm:$0x1]
  %s360 = sld [smem:[#allocation2]]
  %v361 = vstv %s360
  %vm362 = vcmask 261120
  %v364 = vsel %vm362, %v359, 0
  %366 = vmatprep.subr.mxu0 0.0
  %367 = vmatpush1.msra.mxu0 0.0
  %368 = vmatprep.subr.mxu0 0.0
  %369 = vmatpush1.msra.mxu0 0.0
  %370 = vmatprep.subr.mxu0 0.0
  %371 = vmatpush1.msra.mxu0 0.0
  %372 = vmatprep.subr.mxu0 0.0
  %373 = vmatpush1.msra.mxu0 0.0
  %374 = vmatprep.subr.mxu0 0.0
  %375 = vmatpush1.msra.mxu0 0.0
  %376 = vmatprep.subr.mxu0 0.0
  %377 = vmatpush1.msra.mxu0 0.0
  %378 = vmatprep.subr.mxu0 0.0
  %379 = vmatpush1.msra.mxu0 0.0
  %380 = vmatprep.subr.mxu0 0.0
  %381 = vmatpush1.msra.mxu0 0.0
  %382 = vmatprep.subr.mxu0 0.0
  %383 = vmatpush1.msra.mxu0 0.0
  %384 = vmatprep.subr.mxu0 0.0
  %385 = vmatpush1.msra.mxu0 0.0
  %386 = vmatprep.subr.mxu0 0.0
  %387 = vmatpush1.msra.mxu0 0.0
  %388 = vmatprep.subr.mxu0 0.0
  %389 = vmatpush1.msra.mxu0 0.0
  %390 = vmatprep.subr.mxu0 0.0
  %391 = vmatpush1.msra.mxu0 %v358
  %392 = vmatprep.subr.mxu0 0.0
  %393 = vmatpush1.msra.mxu0 %v357
  %394 = vmatprep.subr.mxu0 0.0
  %395 = vmatpush1.msra.mxu0 %v356
  %396 = vmatprep.subr.mxu0 0.0
  %397 = vmatpush1.msra.mxu0 %v355
  %398 = vmatprep.subr.mxu0 0.0
  %399 = vmatpush2.msra.mxu0 0.0
  %400 = vmatprep.subr.mxu0 0.0
  %401 = vmatpush2.msra.mxu0 0.0
  %402 = vmatprep.subr.mxu0 0.0
  %403 = vmatpush2.msra.mxu0 0.0
  %404 = vmatprep.subr.mxu0 0.0
  %405 = vmatpush2.msra.mxu0 0.0
  %406 = vmatprep.subr.mxu0 0.0
  %407 = vmatpush2.msra.mxu0 0.0
  %408 = vmatprep.subr.mxu0 0.0
  %409 = vmatpush2.msra.mxu0 0.0
  %410 = vmatprep.subr.mxu0 0.0
  %411 = vmatpush2.msra.mxu0 0.0
  %412 = vmatprep.subr.mxu0 0.0
  %413 = vmatpush2.msra.mxu0 0.0
  %414 = vmatprep.subr.mxu0 0.0
  %415 = vmatpush2.msra.mxu0 0.0
  %416 = vmatprep.subr.mxu0 0.0
  %417 = vmatpush2.msra.mxu0 0.0
  %418 = vmatprep.subr.mxu0 0.0
  %419 = vmatpush2.msra.mxu0 0.0
  %420 = vmatprep.subr.mxu0 0.0
  %421 = vmatpush2.msra.mxu0 0.0
  %422 = vmatprep.subr.mxu0 0.0
  %423 = vmatpush2.msra.mxu0 0.0
  %424 = vmatprep.subr.mxu0 0.0
  %425 = vmatpush2.msra.mxu0 0.0
  %426 = vmatprep.subr.mxu0 0.0
  %427 = vmatpush2.msra.mxu0 0.0
  %428 = vmatprep.subr.mxu0 0.0
  %429 = vmatpush2.msra.mxu0 0.0
  %430 = vmatprep.mubr.f32.mxu0 0.0
  %431 = vmatmul.mubr.f32.gmra.mxu0 %v364
  %v432 = vpop.f32.mrf.mxu0
  %v433 = vadd.f32 %v361, %v432
  %v434 = vpop.f32.mrf.mxu0
  %435 = vdwg.mxu0
  %436 = vst [vmem:[%s7] sm:$0x1] %v433
  // Predicated region
  $region30: #{critic_forward.1} parent=0 // pred_check
    _
  $region31: #{critic_forward.1} parent=0 // pred_check_branch
    %438 = sbr.rel (0) target = $region33
  $region32: #{critic_forward.1} parent=0 // pred_region
    _
  $region33: #{critic_forward.1} parent=0 // pred_fallthru
    _
  // Predicated region
  $region34: #{critic_forward.1} parent=0 // pred_check
    _
  $region35: #{critic_forward.1} parent=0 // pred_check_branch
    %440 = sbr.rel (0) target = $region37
  $region36: #{critic_forward.1} parent=0 // pred_region
    _
  $region37: #{critic_forward.1} parent=0 // pred_fallthru
    _

</llo_original>
